<compile_context>
chip_gen: v7x
topology: tpu7x:2x2x1
jax: 0.10.0
libtpu: 0.0.40
codegen_flags: <defaults>
</compile_context>

<pallas_src>
import functools

import jax
import jax.numpy as jnp
from jax.experimental import pallas as pl
from jax.experimental.pallas import tpu as pltpu


@functools.lru_cache(maxsize=None)
def _tpu_policy():
    """(vmem_limit_bytes, row_tile) tuned per TPU generation."""
    vmem = None
    try:
        vmem = pltpu.get_tpu_info().vmem_capacity_bytes
    except Exception:
        vmem = None
    if vmem is not None and vmem >= 100 * 1024 * 1024:   # v5e / v6e: 128 MiB VMEM per TC
        return 96 * 1024 * 1024, 512
    return 48 * 1024 * 1024, 256                         # v7x (64 MiB VMEM) / safe fallback


def _nbytes(*arrays):
    return int(sum(int(a.size) * a.dtype.itemsize for a in arrays))


def _row_tile(m, pref):
    if m >= pref:
        return pref
    return max(8, ((m + 7) // 8) * 8)


def _pad_rows(x, tm):
    pad = (-x.shape[0]) % tm
    if pad:
        x = jnp.pad(x, ((0, pad), (0, 0)))
    return x


# ---------------------------------------------------------------------------
# Fused multi-head-attention block: grid = (batch, head), head axis is a
# reduction into an f32 accumulator scratch; Add & LayerNorm epilogue on the
# last head.
# ---------------------------------------------------------------------------

def _mha_block_kernel(x_ref, wqkv_ref, bqkv_ref, wo_ref, bo_ref, g_ref, b_ref,
                      o_ref, acc_ref, *, dh, eps):
    h = pl.program_id(1)

    @pl.when(h == 0)
    def _():
        acc_ref[...] = jnp.zeros_like(acc_ref)

    x = x_ref[0]                                                    # [S, D] bf16

    # Per-head fused q|k|v projection; attention scale pre-folded into q columns.
    qkv = jnp.dot(x, wqkv_ref[0], preferred_element_type=jnp.float32)
    qkv = (qkv + bqkv_ref[0]).astype(jnp.bfloat16)                  # [S, 3*dh] bf16 immediately
    qh = qkv[:, :dh]
    kh = qkv[:, dh:2 * dh]
    vh = qkv[:, 2 * dh:]

    # Scaled dot-product attention for this head (f32 softmax math).
    s = jnp.dot(qh, kh.T, preferred_element_type=jnp.float32)       # [S, S]
    s = s - jnp.max(s, axis=-1, keepdims=True)
    p = jnp.exp(s)
    p = p * pl.reciprocal(jnp.sum(p, axis=-1, keepdims=True), approx=True)
    ctx = jnp.dot(p.astype(jnp.bfloat16), vh,
                  preferred_element_type=jnp.float32)               # [S, dh]

    # Fold the output projection into the head reduction.
    acc_ref[...] += jnp.dot(ctx.astype(jnp.bfloat16), wo_ref[0],
                            preferred_element_type=jnp.float32)     # [S, D]

    @pl.when(h == pl.num_programs(1) - 1)
    def _():
        y = acc_ref[...] + bo_ref[...] + x.astype(jnp.float32)
        mu = jnp.mean(y, axis=-1, keepdims=True)
        var = jnp.mean((y - mu) ** 2, axis=-1, keepdims=True)
        yn = (y - mu) * jax.lax.rsqrt(var + eps)
        o_ref[...] = (yn * g_ref[...] + b_ref[...])[None].astype(o_ref.dtype)


def mha_block(x, wqkv_h, bqkv_h, wo_h, bo, gamma, beta, *, eps=1e-12):
    B, S, D = x.shape
    H, _, dh3 = wqkv_h.shape
    dh = dh3 // 3
    vmem_limit, _ = _tpu_policy()

    flops = B * (2 * S * D * dh3 * H + H * 4 * S * S * dh + 2 * S * (H * dh) * D)
    cost = pl.CostEstimate(
        flops=int(flops),
        transcendentals=int(B * H * S * S),
        bytes_accessed=_nbytes(x, wqkv_h, bqkv_h, wo_h, bo, gamma, beta)
        + int(x.size) * x.dtype.itemsize)

    kern = functools.partial(_mha_block_kernel, dh=dh, eps=eps)
    return pl.pallas_call(
        kern,
        out_shape=jax.ShapeDtypeStruct((B, S, D), x.dtype),
        grid=(B, H),
        in_specs=[
            pl.BlockSpec((1, S, D), lambda b, h: (b, 0, 0)),
            pl.BlockSpec((1, D, dh3), lambda b, h: (h, 0, 0)),
            pl.BlockSpec((1, 1, dh3), lambda b, h: (h, 0, 0)),
            pl.BlockSpec((1, dh, D), lambda b, h: (h, 0, 0)),
            pl.BlockSpec((1, D), lambda b, h: (0, 0)),
            pl.BlockSpec((1, D), lambda b, h: (0, 0)),
            pl.BlockSpec((1, D), lambda b, h: (0, 0)),
        ],
        out_specs=pl.BlockSpec((1, S, D), lambda b, h: (b, 0, 0)),
        scratch_shapes=[pltpu.VMEM((S, D), jnp.float32)],
        compiler_params=pltpu.CompilerParams(
            dimension_semantics=("parallel", "arbitrary"),
            vmem_limit_bytes=vmem_limit),
        cost_estimate=cost,
    )(x, wqkv_h, bqkv_h, wo_h,
      bo.reshape(1, D), gamma.reshape(1, D), beta.reshape(1, D))


# ---------------------------------------------------------------------------
# Fused feed-forward block (gelu(x@w1+b1)@w2+b2 + residual -> LayerNorm)
# ---------------------------------------------------------------------------

def _ffn_block_kernel(x_ref, w1_ref, b1_ref, w2_ref, b2_ref, g_ref, b_ref,
                      o_ref, *, eps):
    x = x_ref[...]                                                  # [tm, D] bf16
    h = jnp.dot(x, w1_ref[...], preferred_element_type=jnp.float32)
    h = jax.nn.gelu(h + b1_ref[...], approximate=True)              # hidden stays in VMEM
    y = jnp.dot(h.astype(w2_ref.dtype), w2_ref[...],
                preferred_element_type=jnp.float32)
    y = y + b2_ref[...] + x.astype(jnp.float32)
    mu = jnp.mean(y, axis=-1, keepdims=True)
    var = jnp.mean((y - mu) ** 2, axis=-1, keepdims=True)
    yn = (y - mu) * jax.lax.rsqrt(var + eps)
    o_ref[...] = (yn * g_ref[...] + b_ref[...]).astype(o_ref.dtype)


def ffn_block(x, w1, b1, w2, b2, gamma, beta, *, eps=1e-12):
    M, D = x.shape
    Hf = w1.shape[1]
    vmem_limit, row_pref = _tpu_policy()
    tm = _row_tile(M, row_pref)
    xp = _pad_rows(x, tm)                                           # pad rows; slice output back
    Mp = xp.shape[0]

    cost = pl.CostEstimate(
        flops=int(4 * Mp * D * Hf),
        transcendentals=int(Mp * Hf),
        bytes_accessed=_nbytes(xp, w1, w2, b1, b2, gamma, beta)
        + Mp * D * x.dtype.itemsize)

    out = pl.pallas_call(
        functools.partial(_ffn_block_kernel, eps=eps),
        out_shape=jax.ShapeDtypeStruct((Mp, D), x.dtype),
        grid=(Mp // tm,),
        in_specs=[
            pl.BlockSpec((tm, D), lambda i: (i, 0)),
            pl.BlockSpec((D, Hf), lambda i: (0, 0)),
            pl.BlockSpec((1, Hf), lambda i: (0, 0)),
            pl.BlockSpec((Hf, D), lambda i: (0, 0)),
            pl.BlockSpec((1, D), lambda i: (0, 0)),
            pl.BlockSpec((1, D), lambda i: (0, 0)),
            pl.BlockSpec((1, D), lambda i: (0, 0)),
        ],
        out_specs=pl.BlockSpec((tm, D), lambda i: (i, 0)),
        compiler_params=pltpu.CompilerParams(
            dimension_semantics=("parallel",),
            vmem_limit_bytes=vmem_limit),
        cost_estimate=cost,
    )(xp, w1, b1.reshape(1, Hf), w2, b2.reshape(1, D),
      gamma.reshape(1, D), beta.reshape(1, D))
    return out[:M]


# ---------------------------------------------------------------------------
# Fused tail: out_proj (gelu) + classification head
# ---------------------------------------------------------------------------

def _head_block_kernel(x_ref, wp_ref, bp_ref, wh_ref, bh_ref, o_ref):
    x = x_ref[...]                                                  # [tm, D] bf16
    f = jnp.dot(x, wp_ref[...], preferred_element_type=jnp.float32)
    f = jax.nn.gelu(f + bp_ref[...], approximate=True)              # features stay in VMEM
    logits = jnp.dot(f.astype(wh_ref.dtype), wh_ref[...],
                     preferred_element_type=jnp.float32)
    o_ref[...] = (logits + bh_ref[...]).astype(o_ref.dtype)


def head_block(x, wp, bp, wh, bh):
    M, D = x.shape
    Hf = wp.shape[1]
    L = wh.shape[1]
    vmem_limit, row_pref = _tpu_policy()
    tm = _row_tile(M, row_pref)
    xp = _pad_rows(x, tm)
    Mp = xp.shape[0]

    cost = pl.CostEstimate(
        flops=int(2 * Mp * D * Hf + 2 * Mp * Hf * L),
        transcendentals=int(Mp * Hf),
        bytes_accessed=_nbytes(xp, wp, wh, bp, bh) + Mp * L * 4)

    out = pl.pallas_call(
        _head_block_kernel,
        out_shape=jax.ShapeDtypeStruct((Mp, L), jnp.float32),
        grid=(Mp // tm,),
        in_specs=[
            pl.BlockSpec((tm, D), lambda i: (i, 0)),
            pl.BlockSpec((D, Hf), lambda i: (0, 0)),
            pl.BlockSpec((1, Hf), lambda i: (0, 0)),
            pl.BlockSpec((Hf, L), lambda i: (0, 0)),
            pl.BlockSpec((1, L), lambda i: (0, 0)),
        ],
        out_specs=pl.BlockSpec((tm, L), lambda i: (i, 0)),
        compiler_params=pltpu.CompilerParams(
            dimension_semantics=("parallel",),
            vmem_limit_bytes=vmem_limit),
        cost_estimate=cost,
    )(xp, wp, bp.reshape(1, Hf), wh, bh.reshape(1, L))
    return out[:M]


# ---------------------------------------------------------------------------
# Parameter init (deterministic, synthetic) and forward pass
# ---------------------------------------------------------------------------

def init_params(key, *, vocab_size, max_len, dim_inp, dim_out,
                dim_intermediate, num_heads, num_layers, labels):
    assert dim_out % num_heads == 0
    wdt = jnp.bfloat16  # matmul operands in bf16 (f32 accumulation inside kernels)
    dh = dim_out // num_heads
    scale = 1.0 / float(dh) ** 0.5

    def nrm(k, shape):
        return 0.02 * jax.random.normal(k, shape, dtype=jnp.float32)

    keys = iter(jax.random.split(key, 8 + 8 * num_layers))
    p = {
        "tok_emb": nrm(next(keys), (vocab_size, dim_inp)),
        "pos_emb": nrm(next(keys), (max_len, dim_inp)),
        "layers": [],
        "out_proj_w": nrm(next(keys), (dim_inp, dim_intermediate)).astype(wdt),
        "out_proj_b": jnp.zeros((dim_intermediate,), jnp.float32),
        "head_w": nrm(next(keys), (dim_intermediate, labels)).astype(wdt),
        "head_b": jnp.zeros((labels,), jnp.float32),
    }

    def split_head_cols(w):        # [D_in, D_out] -> [H, D_in, dh]
        return w.reshape(dim_inp, num_heads, dh).transpose(1, 0, 2)

    for _ in range(num_layers):
        wq = nrm(next(keys), (dim_inp, dim_out))
        wk = nrm(next(keys), (dim_inp, dim_out))
        wv = nrm(next(keys), (dim_inp, dim_out))
        wo = nrm(next(keys), (dim_out, dim_inp))
        bq = jnp.zeros((dim_out,), jnp.float32)
        bk = jnp.zeros((dim_out,), jnp.float32)
        bv = jnp.zeros((dim_out,), jnp.float32)

        # Head-split q|k|v weight slabs with the attention scale folded into q.
        wqkv_h = jnp.concatenate([split_head_cols(wq * scale),
                                  split_head_cols(wk),
                                  split_head_cols(wv)], axis=-1).astype(wdt)
        bqkv_h = jnp.concatenate([(bq * scale).reshape(num_heads, 1, dh),
                                  bk.reshape(num_heads, 1, dh),
                                  bv.reshape(num_heads, 1, dh)], axis=-1)

        layer = {
            "wqkv_h": wqkv_h,                                        # [H, D_in, 3*dh] bf16
            "bqkv_h": bqkv_h,                                        # [H, 1, 3*dh]   f32
            "wo_h": wo.reshape(num_heads, dh, dim_inp).astype(wdt),  # [H, dh, D_in]  bf16
            "bo": jnp.zeros((dim_inp,), jnp.float32),
            "ln1_g": jnp.ones((dim_inp,), jnp.float32),
            "ln1_b": jnp.zeros((dim_inp,), jnp.float32),
            "wf1": nrm(next(keys), (dim_inp, dim_intermediate)).astype(wdt),
            "bf1": jnp.zeros((dim_intermediate,), jnp.float32),
            "wf2": nrm(next(keys), (dim_intermediate, dim_inp)).astype(wdt),
            "bf2": jnp.zeros((dim_inp,), jnp.float32),
            "ln2_g": jnp.ones((dim_inp,), jnp.float32),
            "ln2_b": jnp.zeros((dim_inp,), jnp.float32),
        }
        p["layers"].append(layer)
    return p


def bert_finetune_forward(params, tokens):
    B, S = tokens.shape
    dim_inp = params["tok_emb"].shape[1]

    # Embedding lookup (glue: gather stays in plain JAX).
    emb = jnp.take(params["tok_emb"], tokens, axis=0) + params["pos_emb"][:S][None, :, :]
    x = emb.astype(jnp.bfloat16)                                    # [B, S, D]

    for lyr in params["layers"]:
        # fused per-head QKV-proj -> attention -> out-proj reduction -> Add&LN (one kernel)
        x = mha_block(x, lyr["wqkv_h"], lyr["bqkv_h"], lyr["wo_h"], lyr["bo"],
                      lyr["ln1_g"], lyr["ln1_b"])
        # fused FFN -> Add&LN (one kernel, row-tiled over B*S)
        x = ffn_block(x.reshape(B * S, dim_inp), lyr["wf1"], lyr["bf1"],
                      lyr["wf2"], lyr["bf2"], lyr["ln2_g"], lyr["ln2_b"]
                      ).reshape(B, S, dim_inp)

    # fused out_proj (gelu) + classification head
    logits = head_block(x.reshape(B * S, dim_inp),
                        params["out_proj_w"], params["out_proj_b"],
                        params["head_w"], params["head_b"])
    labels = params["head_w"].shape[1]
    return logits.reshape(B, S, labels)


# ---------------------------------------------------------------------------
# Main
# ---------------------------------------------------------------------------

if __name__ == "__main__":
    # small config
    VOCAB = 100
    B, S = 2, 8
    DIM_INP = 32          # embedding / model dim
    DIM_OUT = 32          # attention projection dim (num_heads * head_dim)
    DIM_INTERMEDIATE = 64
    NUM_HEADS = 4
    NUM_LAYERS = 2
    LABELS = 2

    key = jax.random.PRNGKey(0)
    pkey, tkey = jax.random.split(key)
    params = init_params(
        pkey, vocab_size=VOCAB, max_len=S, dim_inp=DIM_INP, dim_out=DIM_OUT,
        dim_intermediate=DIM_INTERMEDIATE, num_heads=NUM_HEADS,
        num_layers=NUM_LAYERS, labels=LABELS)

    input_token = jax.random.randint(tkey, (B, S), 0, VOCAB, dtype=jnp.int32)

    out = bert_finetune_forward(params, input_token)
    out = jax.block_until_ready(out)
    assert out.shape == (B, S, LABELS), out.shape
    assert jnp.all(jnp.isfinite(out))
    print("KERNEL_OK")
</pallas_src>

<mosaic_0001>
module attributes {stable_mosaic.version = 11 : i64} {
  func.func @_mha_block_kernel(%arg0: i32, %arg1: i32, %arg2: memref<1x8x32xbf16, #tpu.memory_space<vmem>>, %arg3: memref<1x32x24xbf16, #tpu.memory_space<vmem>>, %arg4: memref<1x1x24xf32, #tpu.memory_space<vmem>>, %arg5: memref<1x8x32xbf16, #tpu.memory_space<vmem>>, %arg6: memref<1x32xf32, #tpu.memory_space<vmem>>, %arg7: memref<1x32xf32, #tpu.memory_space<vmem>>, %arg8: memref<1x32xf32, #tpu.memory_space<vmem>>, %arg9: memref<1x8x32xbf16, #tpu.memory_space<vmem>>, %arg10: memref<8x32xf32, #tpu.memory_space<vmem>>) attributes {dimension_semantics = [#tpu.dimension_semantics<parallel>, #tpu.dimension_semantics<arbitrary>], iteration_bounds = array<i64: 2, 4>, scalar_prefetch = 0 : i64, scratch_operands = 1 : i64, tpu.core_type = #tpu.core_type<tc>, window_params = [{transform_indices = @transform_0, window_bounds = array<i64: 1, 8, 32>}, {transform_indices = @transform_1, window_bounds = array<i64: 1, 32, 24>}, {transform_indices = @transform_2, window_bounds = array<i64: 1, 1, 24>}, {transform_indices = @transform_3, window_bounds = array<i64: 1, 8, 32>}, {pipeline_mode = #tpu.pipeline_mode<synchronous>, transform_indices = @transform_4, window_bounds = array<i64: 1, 32>}, {pipeline_mode = #tpu.pipeline_mode<synchronous>, transform_indices = @transform_5, window_bounds = array<i64: 1, 32>}, {pipeline_mode = #tpu.pipeline_mode<synchronous>, transform_indices = @transform_6, window_bounds = array<i64: 1, 32>}, {transform_indices = @transform_7, window_bounds = array<i64: 1, 8, 32>}]} {
    %c0_i32 = arith.constant 0 : i32
    %0 = arith.cmpi eq, %arg1, %c0_i32 : i32
    %1 = arith.extui %0 : i1 to i32
    %c0_i32_0 = arith.constant 0 : i32
    %2 = arith.cmpi ne, %1, %c0_i32_0 : i32
    scf.if %2 {
      %cst_22 = arith.constant 0.000000e+00 : f32
      %40 = vector.broadcast %cst_22 : f32 to vector<8x32xf32>
      %c0_23 = arith.constant 0 : index
      %c0_24 = arith.constant 0 : index
      %41 = vector.load %arg10[%c0_23, %c0_24] : memref<8x32xf32, #tpu.memory_space<vmem>>, vector<8x32xf32>
      tpu.vector_store %arg10[%c0_23, %c0_24], %40 {strides = array<i32>} : memref<8x32xf32, #tpu.memory_space<vmem>>, vector<8x32xf32>,
    } else {
    }
    %c0 = arith.constant 0 : index
    %c0_1 = arith.constant 0 : index
    %c0_2 = arith.constant 0 : index
    %3 = vector.load %arg2[%c0, %c0_1, %c0_2] : memref<1x8x32xbf16, #tpu.memory_space<vmem>>, vector<1x8x32xbf16>
    %4 = vector.shape_cast %3 : vector<1x8x32xbf16> to vector<8x32xbf16>
    %c0_3 = arith.constant 0 : index
    %c0_4 = arith.constant 0 : index
    %c0_5 = arith.constant 0 : index
    %5 = vector.load %arg3[%c0_3, %c0_4, %c0_5] : memref<1x32x24xbf16, #tpu.memory_space<vmem>>, vector<1x32x24xbf16>
    %6 = vector.shape_cast %5 : vector<1x32x24xbf16> to vector<32x24xbf16>
    %cst = arith.constant dense<0.000000e+00> : vector<8x24xf32>
    %7 = tpu.matmul %4, %6, %cst {dimension_numbers = #tpu.dot_dimension_numbers<[1], [0], [0], [1], [0, 0, 1, 1], [], []>} : vector<8x32xbf16>, vector<32x24xbf16>, vector<8x24xf32> -> vector<8x24xf32>
    %c0_6 = arith.constant 0 : index
    %c0_7 = arith.constant 0 : index
    %c0_8 = arith.constant 0 : index
    %8 = vector.load %arg4[%c0_6, %c0_7, %c0_8] : memref<1x1x24xf32, #tpu.memory_space<vmem>>, vector<1x1x24xf32>
    %9 = vector.shape_cast %8 : vector<1x1x24xf32> to vector<1x24xf32>
    %10 = vector.broadcast %9 : vector<1x24xf32> to vector<8x24xf32>
    %11 = arith.addf %7, %10 : vector<8x24xf32>
    %12 = arith.truncf %11 : vector<8x24xf32> to vector<8x24xbf16>
    %13 = vector.extract_strided_slice %12 {offsets = [0, 0], sizes = [8, 8], strides = [1, 1]} : vector<8x24xbf16> to vector<8x8xbf16>
    %14 = vector.extract_strided_slice %12 {offsets = [0, 8], sizes = [8, 8], strides = [1, 1]} : vector<8x24xbf16> to vector<8x8xbf16>
    %15 = vector.extract_strided_slice %12 {offsets = [0, 16], sizes = [8, 8], strides = [1, 1]} : vector<8x24xbf16> to vector<8x8xbf16>
    %16 = tpu.transpose %14, [1, 0] : vector<8x8xbf16> -> vector<8x8xbf16>
    %cst_9 = arith.constant dense<0.000000e+00> : vector<8x8xf32>
    %17 = tpu.matmul %13, %16, %cst_9 {dimension_numbers = #tpu.dot_dimension_numbers<[1], [0], [0], [1], [0, 0, 1, 1], [], []>} : vector<8x8xbf16>, vector<8x8xbf16>, vector<8x8xf32> -> vector<8x8xf32>
    %cst_10 = arith.constant dense<0xFF800000> : vector<8xf32>
    %18 = vector.multi_reduction <maximumf>, %17, %cst_10 [1] : vector<8x8xf32> to vector<8xf32>
    %19 = vector.shape_cast %18 : vector<8xf32> to vector<8x1xf32>
    %20 = vector.broadcast %19 : vector<8x1xf32> to vector<8x8xf32>
    %21 = arith.subf %17, %20 : vector<8x8xf32>
    %22 = math.exp %21 : vector<8x8xf32>
    %cst_11 = arith.constant dense<0.000000e+00> : vector<8xf32>
    %23 = vector.multi_reduction <add>, %22, %cst_11 [1] : vector<8x8xf32> to vector<8xf32>
    %24 = vector.shape_cast %23 : vector<8xf32> to vector<8x1xf32>
    %25 = tpu.reciprocal %24 {approx = true} : vector<8x1xf32> -> vector<8x1xf32>
    %26 = vector.broadcast %25 : vector<8x1xf32> to vector<8x8xf32>
    %27 = arith.mulf %22, %26 : vector<8x8xf32>
    %28 = arith.truncf %27 : vector<8x8xf32> to vector<8x8xbf16>
    %cst_12 = arith.constant dense<0.000000e+00> : vector<8x8xf32>
    %29 = tpu.matmul %28, %15, %cst_12 {dimension_numbers = #tpu.dot_dimension_numbers<[1], [0], [0], [1], [0, 0, 1, 1], [], []>} : vector<8x8xbf16>, vector<8x8xbf16>, vector<8x8xf32> -> vector<8x8xf32>
    %c0_13 = arith.constant 0 : index
    %c0_14 = arith.constant 0 : index
    %30 = vector.load %arg10[%c0_13, %c0_14] : memref<8x32xf32, #tpu.memory_space<vmem>>, vector<8x32xf32>
    %31 = arith.truncf %29 : vector<8x8xf32> to vector<8x8xbf16>
    %c0_15 = arith.constant 0 : index
    %c0_16 = arith.constant 0 : index
    %c0_17 = arith.constant 0 : index
    %32 = vector.load %arg5[%c0_15, %c0_16, %c0_17] : memref<1x8x32xbf16, #tpu.memory_space<vmem>>, vector<1x8x32xbf16>
    %33 = vector.shape_cast %32 : vector<1x8x32xbf16> to vector<8x32xbf16>
    %cst_18 = arith.constant dense<0.000000e+00> : vector<8x32xf32>
    %34 = tpu.matmul %31, %33, %cst_18 {dimension_numbers = #tpu.dot_dimension_numbers<[1], [0], [0], [1], [0, 0, 1, 1], [], []>} : vector<8x8xbf16>, vector<8x32xbf16>, vector<8x32xf32> -> vector<8x32xf32>
    %35 = arith.addf %30, %34 : vector<8x32xf32>
    %c0_19 = arith.constant 0 : index
    %c0_20 = arith.constant 0 : index
    %36 = vector.load %arg10[%c0_19, %c0_20] : memref<8x32xf32, #tpu.memory_space<vmem>>, vector<8x32xf32>
    tpu.vector_store %arg10[%c0_19, %c0_20], %35 {strides = array<i32>} : memref<8x32xf32, #tpu.memory_space<vmem>>, vector<8x32xf32>,
    %c3_i32 = arith.constant 3 : i32
    %37 = arith.cmpi eq, %arg1, %c3_i32 : i32
    %38 = arith.extui %37 : i1 to i32
    %c0_i32_21 = arith.constant 0 : i32
    %39 = arith.cmpi ne, %38, %c0_i32_21 : i32
    scf.if %39 {
      %c0_22 = arith.constant 0 : index
      %c0_23 = arith.constant 0 : index
      %40 = vector.load %arg10[%c0_22, %c0_23] : memref<8x32xf32, #tpu.memory_space<vmem>>, vector<8x32xf32>
      %c0_24 = arith.constant 0 : index
      %c0_25 = arith.constant 0 : index
      %41 = vector.load %arg6[%c0_24, %c0_25] : memref<1x32xf32, #tpu.memory_space<vmem>>, vector<1x32xf32>
      %42 = vector.broadcast %41 : vector<1x32xf32> to vector<8x32xf32>
      %43 = arith.addf %40, %42 : vector<8x32xf32>
      %44 = arith.extf %4 : vector<8x32xbf16> to vector<8x32xf32>
      %45 = arith.addf %43, %44 : vector<8x32xf32>
      %cst_26 = arith.constant dense<0.000000e+00> : vector<8xf32>
      %46 = vector.multi_reduction <add>, %45, %cst_26 [1] : vector<8x32xf32> to vector<8xf32>
      %47 = vector.shape_cast %46 : vector<8xf32> to vector<8x1xf32>
      %cst_27 = arith.constant 3.200000e+01 : f32
      %48 = vector.broadcast %cst_27 : f32 to vector<8x1xf32>
      %49 = arith.divf %47, %48 : vector<8x1xf32>
      %50 = vector.broadcast %49 : vector<8x1xf32> to vector<8x32xf32>
      %51 = arith.subf %45, %50 : vector<8x32xf32>
      %52 = arith.mulf %51, %51 : vector<8x32xf32>
      %cst_28 = arith.constant dense<0.000000e+00> : vector<8xf32>
      %53 = vector.multi_reduction <add>, %52, %cst_28 [1] : vector<8x32xf32> to vector<8xf32>
      %54 = vector.shape_cast %53 : vector<8xf32> to vector<8x1xf32>
      %cst_29 = arith.constant 3.200000e+01 : f32
      %55 = vector.broadcast %cst_29 : f32 to vector<8x1xf32>
      %56 = arith.divf %54, %55 : vector<8x1xf32>
      %57 = vector.broadcast %49 : vector<8x1xf32> to vector<8x32xf32>
      %58 = arith.subf %45, %57 : vector<8x32xf32>
      %cst_30 = arith.constant 9.99999996E-13 : f32
      %59 = vector.broadcast %cst_30 : f32 to vector<8x1xf32>
      %60 = arith.addf %56, %59 : vector<8x1xf32>
      %61 = math.rsqrt %60 : vector<8x1xf32>
      %62 = vector.broadcast %61 : vector<8x1xf32> to vector<8x32xf32>
      %63 = arith.mulf %58, %62 : vector<8x32xf32>
      %c0_31 = arith.constant 0 : index
      %c0_32 = arith.constant 0 : index
      %64 = vector.load %arg7[%c0_31, %c0_32] : memref<1x32xf32, #tpu.memory_space<vmem>>, vector<1x32xf32>
      %65 = vector.broadcast %64 : vector<1x32xf32> to vector<8x32xf32>
      %66 = arith.mulf %63, %65 : vector<8x32xf32>
      %c0_33 = arith.constant 0 : index
      %c0_34 = arith.constant 0 : index
      %67 = vector.load %arg8[%c0_33, %c0_34] : memref<1x32xf32, #tpu.memory_space<vmem>>, vector<1x32xf32>
      %68 = vector.broadcast %67 : vector<1x32xf32> to vector<8x32xf32>
      %69 = arith.addf %66, %68 : vector<8x32xf32>
      %70 = vector.shape_cast %69 : vector<8x32xf32> to vector<1x8x32xf32>
      %71 = arith.truncf %70 : vector<1x8x32xf32> to vector<1x8x32xbf16>
      %c0_35 = arith.constant 0 : index
      %c0_36 = arith.constant 0 : index
      %c0_37 = arith.constant 0 : index
      %72 = vector.load %arg9[%c0_35, %c0_36, %c0_37] : memref<1x8x32xbf16, #tpu.memory_space<vmem>>, vector<1x8x32xbf16>
      tpu.vector_store %arg9[%c0_35, %c0_36, %c0_37], %71 {strides = array<i32>} : memref<1x8x32xbf16, #tpu.memory_space<vmem>>, vector<1x8x32xbf16>,
    } else {
    }
    return
  }
  func.func @transform_0(%arg0: i32, %arg1: i32) -> (i32, i32, i32) {
    %c0_i32 = arith.constant 0 : i32
    %c0_i32_0 = arith.constant 0 : i32
    %c0_i32_1 = arith.constant 0 : i32
    return %arg0, %c0_i32, %c0_i32_0 : i32, i32, i32
  }
  func.func @transform_1(%arg0: i32, %arg1: i32) -> (i32, i32, i32) {
    %c0_i32 = arith.constant 0 : i32
    %c0_i32_0 = arith.constant 0 : i32
    %c0_i32_1 = arith.constant 0 : i32
    return %arg1, %c0_i32, %c0_i32_0 : i32, i32, i32
  }
  func.func @transform_2(%arg0: i32, %arg1: i32) -> (i32, i32, i32) {
    %c0_i32 = arith.constant 0 : i32
    %c0_i32_0 = arith.constant 0 : i32
    %c0_i32_1 = arith.constant 0 : i32
    return %arg1, %c0_i32, %c0_i32_0 : i32, i32, i32
  }
  func.func @transform_3(%arg0: i32, %arg1: i32) -> (i32, i32, i32) {
    %c0_i32 = arith.constant 0 : i32
    %c0_i32_0 = arith.constant 0 : i32
    %c0_i32_1 = arith.constant 0 : i32
    return %arg1, %c0_i32, %c0_i32_0 : i32, i32, i32
  }
  func.func @transform_4(%arg0: i32, %arg1: i32) -> (i32, i32) {
    %c0_i32 = arith.constant 0 : i32
    %c0_i32_0 = arith.constant 0 : i32
    %c0_i32_1 = arith.constant 0 : i32
    return %c0_i32, %c0_i32_0 : i32, i32
  }
  func.func @transform_5(%arg0: i32, %arg1: i32) -> (i32, i32) {
    %c0_i32 = arith.constant 0 : i32
    %c0_i32_0 = arith.constant 0 : i32
    %c0_i32_1 = arith.constant 0 : i32
    return %c0_i32, %c0_i32_0 : i32, i32
  }
  func.func @transform_6(%arg0: i32, %arg1: i32) -> (i32, i32) {
    %c0_i32 = arith.constant 0 : i32
    %c0_i32_0 = arith.constant 0 : i32
    %c0_i32_1 = arith.constant 0 : i32
    return %c0_i32, %c0_i32_0 : i32, i32
  }
  func.func @transform_7(%arg0: i32, %arg1: i32) -> (i32, i32, i32) {
    %c0_i32 = arith.constant 0 : i32
    %c0_i32_0 = arith.constant 0 : i32
    %c0_i32_1 = arith.constant 0 : i32
    return %arg0, %c0_i32, %c0_i32_0 : i32, i32, i32
  }
}

</mosaic_0001>

<llo_original>
// kernel: tpu_custom_call.1
$region0: #{tpu_custom_call.1}
  #allocation0 [shape = 'u32[]', space=smem, size = 0x4, offset = 0x4, fixed_abs, tag = 'smem constant byte address 0x4 - core index']
  #allocation1 [shape = 'u32[144,128]{1,0:T(1,128)}', space=vmem, size = 0x12000, scoped, tag = 'internal scratch']
  #allocation2 [shape = 'f32[8,32]{1,0:T(8,128)}', space=vmem, size = 0x1000, scoped, tag = 'scratch operand']
  %s0 = inlined_call_operand.vmem [shape: bf16[2,8,32], index: 0, kind: input, shape index: {}]
  %s1 = inlined_call_operand.vmem [shape: bf16[4,32,24], index: 1, kind: input, shape index: {}]
  %s2 = inlined_call_operand.vmem [shape: f32[4,1,24], index: 2, kind: input, shape index: {}]
  %s3 = inlined_call_operand.vmem [shape: bf16[4,8,32], index: 3, kind: input, shape index: {}]
  %s4 = inlined_call_operand.vmem [shape: f32[1,32], index: 4, kind: input, shape index: {}]
  %s5 = inlined_call_operand.vmem [shape: f32[1,32], index: 5, kind: input, shape index: {}]
  %s6 = inlined_call_operand.vmem [shape: f32[1,32], index: 6, kind: input, shape index: {}]
  %s7 = inlined_call_operand.hbm [shape: bf16[2,8,32], index: 7, kind: output, shape index: {}]
  %s8 = sld [smem:[#allocation0]]
  $region69: #{tpu_custom_call.1} parent=0
    _
  %s10 = ssub.s32 1, %s8
  %s11 = scalar_select 0, %s10, %s8
  $region1: #{tpu_custom_call.1} parent=0
    #allocation3 [shape = 'u8[4096]{0}', space=vmem, size = 0x1000, scoped, tag = 'output window, operand 0']
    #allocation4 [shape = 's32[2]{0}', space=sflag, size = 0x8, scoped, tag = 'scoped memory for tpu_custom_call.1']
    %12 = vsyncpa [#allocation4], 0
    %s13 = scalar_lea.sflag [#allocation4], 1
    %14 = vsyncpa %s13, 0
    loop: start=0, step=1, limit=10
    $region2: #{tpu_custom_call.1} parent=1 // loop_pre_header
      _
    $region3: #{tpu_custom_call.1} parent=1 // loop_header
      %s16 = sphi 0, %s20
      %p17 = scmp.ge.s32.totalorder %s16, 10
      %s23 = sphi 0, %s35
      %s24 = sphi 0, %s31
      %s25 = sphi 0, %s23
      %s26 = sphi 0, %s24
      %s27 = sphi 0, %s25
      %s28 = sphi 0, %s26
      %s38 = sphi 0, %s40
      %s41 = sphi 0, %s38
      %s42 = sphi 0, %s41
      %s58 = sphi 0, %s42
      %s64 = sphi 0, %s66
      %s67 = sphi 0, %s64
      %s68 = sphi 0, %s67
      %s84 = sphi 0, %s68
      %s90 = sphi 0, %s92
      %s93 = sphi 0, %s90
      %s94 = sphi 0, %s93
      %s110 = sphi 0, %s94
      %s116 = sphi 0, %s118
      %s119 = sphi 0, %s116
      %s120 = sphi 0, %s119
      %s136 = sphi 0, %s120
      %s140 = sphi 0, %s140
      %s142 = sphi 0, %s140
      %s143 = sphi 0, %s142
      %s157 = sphi 0, %s143
      %s161 = sphi 0, %s161
      %s163 = sphi 0, %s161
      %s164 = sphi 0, %s163
      %s178 = sphi 0, %s164
      %s182 = sphi 0, %s182
      %s184 = sphi 0, %s182
      %s185 = sphi 0, %s184
      %s199 = sphi 0, %s185
      %s205 = sphi 0, %s207
      %s208 = sphi 0, %s205
      %s209 = sphi 0, %s208
      %s225 = sphi 0, %s209
    $region4: #{tpu_custom_call.1} parent=1 // loop_header_branch
      %19 = sbr.rel (%p17) target = $region8
    $region5: #{tpu_custom_call.1} parent=1 // loop_body
      %s21 = ssub.s32 %s16, 1
      %s22 = ssub.s32 %s16, 2
      %s29 = sadd.s32 1, %s24
      %p30 = scmp.ge.s32.totalorder %s29, 4
      %s31 = scalar_select %p30, 0, %s29
      %s32 = sadd.s32 1, %s23
      %s33 = scalar_select %p30, %s32, %s23
      %p34 = scmp.ge.s32.totalorder %s33, 2
      %s35 = scalar_select %p34, 0, %s33
      %s36 = ssub.s32 %s23, %s35
      %p37 = scmp.eq.s32.totalorder %s36, 0
      %s39 = sadd.s32 %s38, 1
      %s40 = scalar_select %p37, %s38, %s39
      %p43 = pneg %p37
      %p44 = scmp.eq.s32.totalorder %s16, 7
      %p45 = por %p43, %p44
      %p46 = scmp.ne.s32.totalorder %s38, %s41
      %p47 = scmp.eq.s32.totalorder %s16, 0
      %p48 = por %p46, %p47
      %p49 = scmp.ne.s32.totalorder %s38, %s41
      %p50 = scmp.eq.s32.totalorder %s21, 7
      %p51 = por %p49, %p50
      %p52 = scmp.ne.s32.totalorder %s41, %s42
      %p53 = scmp.eq.s32.totalorder %s21, 0
      %p54 = por %p52, %p53
      %p55 = scmp.ne.s32.totalorder %s41, %s42
      %p56 = scmp.eq.s32.totalorder %s22, 7
      %p57 = por %p55, %p56
      %p59 = scmp.ne.s32.totalorder %s42, %s58
      %p60 = scmp.eq.s32.totalorder %s22, 0
      %p61 = por %p59, %p60
      %s62 = ssub.s32 %s24, %s31
      %p63 = scmp.eq.s32.totalorder %s62, 0
      %s65 = sadd.s32 %s64, 1
      %s66 = scalar_select %p63, %s64, %s65
      %p69 = pneg %p63
      %p70 = scmp.eq.s32.totalorder %s16, 7
      %p71 = por %p69, %p70
      %p72 = scmp.ne.s32.totalorder %s64, %s67
      %p73 = scmp.eq.s32.totalorder %s16, 0
      %p74 = por %p72, %p73
      %p75 = scmp.ne.s32.totalorder %s64, %s67
      %p76 = scmp.eq.s32.totalorder %s21, 7
      %p77 = por %p75, %p76
      %p78 = scmp.ne.s32.totalorder %s67, %s68
      %p79 = scmp.eq.s32.totalorder %s21, 0
      %p80 = por %p78, %p79
      %p81 = scmp.ne.s32.totalorder %s67, %s68
      %p82 = scmp.eq.s32.totalorder %s22, 7
      %p83 = por %p81, %p82
      %p85 = scmp.ne.s32.totalorder %s68, %s84
      %p86 = scmp.eq.s32.totalorder %s22, 0
      %p87 = por %p85, %p86
      %s88 = ssub.s32 %s24, %s31
      %p89 = scmp.eq.s32.totalorder %s88, 0
      %s91 = sadd.s32 %s90, 1
      %s92 = scalar_select %p89, %s90, %s91
      %p95 = pneg %p89
      %p96 = scmp.eq.s32.totalorder %s16, 7
      %p97 = por %p95, %p96
      %p98 = scmp.ne.s32.totalorder %s90, %s93
      %p99 = scmp.eq.s32.totalorder %s16, 0
      %p100 = por %p98, %p99
      %p101 = scmp.ne.s32.totalorder %s90, %s93
      %p102 = scmp.eq.s32.totalorder %s21, 7
      %p103 = por %p101, %p102
      %p104 = scmp.ne.s32.totalorder %s93, %s94
      %p105 = scmp.eq.s32.totalorder %s21, 0
      %p106 = por %p104, %p105
      %p107 = scmp.ne.s32.totalorder %s93, %s94
      %p108 = scmp.eq.s32.totalorder %s22, 7
      %p109 = por %p107, %p108
      %p111 = scmp.ne.s32.totalorder %s94, %s110
      %p112 = scmp.eq.s32.totalorder %s22, 0
      %p113 = por %p111, %p112
      %s114 = ssub.s32 %s24, %s31
      %p115 = scmp.eq.s32.totalorder %s114, 0
      %s117 = sadd.s32 %s116, 1
      %s118 = scalar_select %p115, %s116, %s117
      %p121 = pneg %p115
      %p122 = scmp.eq.s32.totalorder %s16, 7
      %p123 = por %p121, %p122
      %p124 = scmp.ne.s32.totalorder %s116, %s119
      %p125 = scmp.eq.s32.totalorder %s16, 0
      %p126 = por %p124, %p125
      %p127 = scmp.ne.s32.totalorder %s116, %s119
      %p128 = scmp.eq.s32.totalorder %s21, 7
      %p129 = por %p127, %p128
      %p130 = scmp.ne.s32.totalorder %s119, %s120
      %p131 = scmp.eq.s32.totalorder %s21, 0
      %p132 = por %p130, %p131
      %p133 = scmp.ne.s32.totalorder %s119, %s120
      %p134 = scmp.eq.s32.totalorder %s22, 7
      %p135 = por %p133, %p134
      %p137 = scmp.ne.s32.totalorder %s120, %s136
      %p138 = scmp.eq.s32.totalorder %s22, 0
      %p139 = por %p137, %p138
      %s141 = sadd.s32 %s140, 1
      %p144 = scmp.eq.s32.totalorder %s16, 7
      %p145 = scmp.ne.s32.totalorder %s140, %s142
      %p146 = scmp.eq.s32.totalorder %s16, 0
      %p147 = por %p145, %p146
      %p148 = scmp.ne.s32.totalorder %s140, %s142
      %p149 = scmp.eq.s32.totalorder %s21, 7
      %p150 = por %p148, %p149
      %p151 = scmp.ne.s32.totalorder %s142, %s143
      %p152 = scmp.eq.s32.totalorder %s21, 0
      %p153 = por %p151, %p152
      %p154 = scmp.ne.s32.totalorder %s142, %s143
      %p155 = scmp.eq.s32.totalorder %s22, 7
      %p156 = por %p154, %p155
      %p158 = scmp.ne.s32.totalorder %s143, %s157
      %p159 = scmp.eq.s32.totalorder %s22, 0
      %p160 = por %p158, %p159
      %s162 = sadd.s32 %s161, 1
      %p165 = scmp.eq.s32.totalorder %s16, 7
      %p166 = scmp.ne.s32.totalorder %s161, %s163
      %p167 = scmp.eq.s32.totalorder %s16, 0
      %p168 = por %p166, %p167
      %p169 = scmp.ne.s32.totalorder %s161, %s163
      %p170 = scmp.eq.s32.totalorder %s21, 7
      %p171 = por %p169, %p170
      %p172 = scmp.ne.s32.totalorder %s163, %s164
      %p173 = scmp.eq.s32.totalorder %s21, 0
      %p174 = por %p172, %p173
      %p175 = scmp.ne.s32.totalorder %s163, %s164
      %p176 = scmp.eq.s32.totalorder %s22, 7
      %p177 = por %p175, %p176
      %p179 = scmp.ne.s32.totalorder %s164, %s178
      %p180 = scmp.eq.s32.totalorder %s22, 0
      %p181 = por %p179, %p180
      %s183 = sadd.s32 %s182, 1
      %p186 = scmp.eq.s32.totalorder %s16, 7
      %p187 = scmp.ne.s32.totalorder %s182, %s184
      %p188 = scmp.eq.s32.totalorder %s16, 0
      %p189 = por %p187, %p188
      %p190 = scmp.ne.s32.totalorder %s182, %s184
      %p191 = scmp.eq.s32.totalorder %s21, 7
      %p192 = por %p190, %p191
      %p193 = scmp.ne.s32.totalorder %s184, %s185
      %p194 = scmp.eq.s32.totalorder %s21, 0
      %p195 = por %p193, %p194
      %p196 = scmp.ne.s32.totalorder %s184, %s185
      %p197 = scmp.eq.s32.totalorder %s22, 7
      %p198 = por %p196, %p197
      %p200 = scmp.ne.s32.totalorder %s185, %s199
      %p201 = scmp.eq.s32.totalorder %s22, 0
      %p202 = por %p200, %p201
      %s203 = ssub.s32 %s23, %s35
      %p204 = scmp.eq.s32.totalorder %s203, 0
      %s206 = sadd.s32 %s205, 1
      %s207 = scalar_select %p204, %s205, %s206
      %p210 = pneg %p204
      %p211 = scmp.eq.s32.totalorder %s16, 7
      %p212 = por %p210, %p211
      %p213 = scmp.ne.s32.totalorder %s205, %s208
      %p214 = scmp.eq.s32.totalorder %s16, 0
      %p215 = por %p213, %p214
      %p216 = scmp.ne.s32.totalorder %s205, %s208
      %p217 = scmp.eq.s32.totalorder %s21, 7
      %p218 = por %p216, %p217
      %p219 = scmp.ne.s32.totalorder %s208, %s209
      %p220 = scmp.eq.s32.totalorder %s21, 0
      %p221 = por %p219, %p220
      %p222 = scmp.ne.s32.totalorder %s208, %s209
      %p223 = scmp.eq.s32.totalorder %s22, 7
      %p224 = por %p222, %p223
      %p226 = scmp.ne.s32.totalorder %s209, %s225
      %p227 = scmp.eq.s32.totalorder %s22, 0
      %p228 = por %p226, %p227
      %p229 = scmp.le.s32.totalorder 1, %s16
      %p230 = scmp.lt.s32.totalorder %s16, 9
      %p231 = pnand %p229, %p230
      %p232 = pneg %p231
      // Predicated region
      $region9: #{tpu_custom_call.1} parent=5 // pred_check
        _
      $region10: #{tpu_custom_call.1} parent=5 // pred_check_branch
        %234 = sbr.rel (%p231) target = $region12
      $region11: #{tpu_custom_call.1} parent=5 // pred_region
        %s235 = ssub.s32 %s16, 1
        // Predicated region
        $region13: #{tpu_custom_call.1} parent=11 // pred_check
          %p236 = pneg %p153
        $region14: #{tpu_custom_call.1} parent=11 // pred_check_branch
          %238 = sbr.rel (%p236) target = $region16
        $region15: #{tpu_custom_call.1} parent=11 // pred_region
          _
        $region16: #{tpu_custom_call.1} parent=11 // pred_fallthru
          _
        // Predicated region
        $region17: #{tpu_custom_call.1} parent=11 // pred_check
          %p239 = pneg %p174
        $region18: #{tpu_custom_call.1} parent=11 // pred_check_branch
          %241 = sbr.rel (%p239) target = $region20
        $region19: #{tpu_custom_call.1} parent=11 // pred_region
          _
        $region20: #{tpu_custom_call.1} parent=11 // pred_fallthru
          _
        // Predicated region
        $region21: #{tpu_custom_call.1} parent=11 // pred_check
          %p242 = pneg %p195
        $region22: #{tpu_custom_call.1} parent=11 // pred_check_branch
          %244 = sbr.rel (%p242) target = $region24
        $region23: #{tpu_custom_call.1} parent=11 // pred_region
          _
        $region24: #{tpu_custom_call.1} parent=11 // pred_fallthru
          _
      $region12: #{tpu_custom_call.1} parent=5 // pred_fallthru
        _
      %p245 = scmp.lt.s32.totalorder %s16, 8
      // Predicated region
      $region25: #{tpu_custom_call.1} parent=5 // pred_check
        %p246 = pneg %p245
      $region26: #{tpu_custom_call.1} parent=5 // pred_check_branch
        %248 = sbr.rel (%p246) target = $region28
      $region27: #{tpu_custom_call.1} parent=5 // pred_region
        // Predicated region
        $region29: #{tpu_custom_call.1} parent=27 // pred_check
          %p249 = pneg %p48
        $region30: #{tpu_custom_call.1} parent=27 // pred_check_branch
          %251 = sbr.rel (%p249) target = $region32
        $region31: #{tpu_custom_call.1} parent=27 // pred_region
          %p252 = scmp.lt.s32.totalorder %s23, 1
          %s253 = scalar_select %p252, %s23, 1
          %s254 = smul.addr %s253, 4
          %s255 = scalar_lea.vmem %s0, %s254
        $region32: #{tpu_custom_call.1} parent=27 // pred_fallthru
          _
        // Predicated region
        $region33: #{tpu_custom_call.1} parent=27 // pred_check
          %p256 = pneg %p74
        $region34: #{tpu_custom_call.1} parent=27 // pred_check_branch
          %258 = sbr.rel (%p256) target = $region36
        $region35: #{tpu_custom_call.1} parent=27 // pred_region
          %p259 = scmp.lt.s32.totalorder %s24, 3
          %s260 = scalar_select %p259, %s24, 3
          %s261 = smul.addr %s260, 4
          %s262 = smul.addr %s261, 4
          %s263 = scalar_lea.vmem %s1, %s262
        $region36: #{tpu_custom_call.1} parent=27 // pred_fallthru
          _
        // Predicated region
        $region37: #{tpu_custom_call.1} parent=27 // pred_check
          %p264 = pneg %p100
        $region38: #{tpu_custom_call.1} parent=27 // pred_check_branch
          %266 = sbr.rel (%p264) target = $region40
        $region39: #{tpu_custom_call.1} parent=27 // pred_region
          %p267 = scmp.lt.s32.totalorder %s24, 3
          %s268 = scalar_select %p267, %s24, 3
          %s269 = scalar_lea.vmem %s2, %s268
        $region40: #{tpu_custom_call.1} parent=27 // pred_fallthru
          _
        // Predicated region
        $region41: #{tpu_custom_call.1} parent=27 // pred_check
          %p270 = pneg %p126
        $region42: #{tpu_custom_call.1} parent=27 // pred_check_branch
          %272 = sbr.rel (%p270) target = $region44
        $region43: #{tpu_custom_call.1} parent=27 // pred_region
          %p273 = scmp.lt.s32.totalorder %s24, 3
          %s274 = scalar_select %p273, %s24, 3
          %s275 = smul.addr %s274, 4
          %s276 = scalar_lea.vmem %s3, %s275
        $region44: #{tpu_custom_call.1} parent=27 // pred_fallthru
          _
      $region28: #{tpu_custom_call.1} parent=5 // pred_fallthru
        _
      %p277 = scmp.le.s32.totalorder 1, %s16
      %p278 = scmp.lt.s32.totalorder %s16, 9
      %p279 = pnand %p277, %p278
      %p280 = pneg %p279
      // Predicated region
      $region45: #{tpu_custom_call.1} parent=5 // pred_check
        _
      $region46: #{tpu_custom_call.1} parent=5 // pred_check_branch
        %282 = sbr.rel (%p279) target = $region48
      $region47: #{tpu_custom_call.1} parent=5 // pred_region
        %s283 = ssub.s32 %s16, 1
        %p284 = scmp.lt.s32.totalorder %s25, 1
        %s285 = scalar_select %p284, %s25, 1
        %s286 = smul.addr %s285, 4
        %s287 = scalar_lea.vmem %s0, %s286
        %p288 = pneg %p54
        %p289 = pneg %p51
        %p290 = scmp.lt.s32.totalorder %s26, 3
        %s291 = scalar_select %p290, %s26, 3
        %s292 = smul.addr %s291, 4
        %s293 = smul.addr %s292, 4
        %s294 = scalar_lea.vmem %s1, %s293
        %p295 = pneg %p80
        %p296 = pneg %p77
        %p297 = scmp.lt.s32.totalorder %s26, 3
        %s298 = scalar_select %p297, %s26, 3
        %s299 = scalar_lea.vmem %s2, %s298
        %p300 = pneg %p106
        %p301 = pneg %p103
        %p302 = scmp.lt.s32.totalorder %s26, 3
        %s303 = scalar_select %p302, %s26, 3
        %s304 = smul.addr %s303, 4
        %s305 = scalar_lea.vmem %s3, %s304
        %p306 = pneg %p132
        %p307 = pneg %p129
        %p308 = pneg %p153
        %p309 = pneg %p150
        %p310 = pneg %p174
        %p311 = pneg %p171
        %p312 = pneg %p195
        %p313 = pneg %p192
        %p314 = pneg %p221
        %p315 = pneg %p218
        %s316 = sand.u32 %s208, 1
        %s317 = scalar_lea.sflag [#allocation4], %s316
        %s318 = sand.u32 %s208, 1
        %s319 = smul.addr %s318, 4
        %s320 = scalar_lea.vmem [#allocation3], %s319
        %p321 = scmp.lt.s32.totalorder %s25, 1
        %s322 = scalar_select %p321, %s25, 1
        %s323 = smul.addr %s322, 4
        %s324 = scalar_lea.vmem %s0, %s323
        %p325 = scmp.lt.s32.totalorder %s26, 3
        %s326 = scalar_select %p325, %s26, 3
        %s327 = smul.addr %s326, 4
        %s328 = smul.addr %s327, 4
        %s329 = scalar_lea.vmem %s1, %s328
        %p330 = scmp.lt.s32.totalorder %s26, 3
        %s331 = scalar_select %p330, %s26, 3
        %s332 = scalar_lea.vmem %s2, %s331
        %p333 = scmp.lt.s32.totalorder %s26, 3
        %s334 = scalar_select %p333, %s26, 3
        %s335 = smul.addr %s334, 4
        %s336 = scalar_lea.vmem %s3, %s335
        %p338 = scmp.eq.s32.totalorder %s26, 0
        // Predicated region
        $region49: #{tpu_custom_call.1} parent=47 // pred_check
          %p339 = pneg %p338
        $region50: #{tpu_custom_call.1} parent=47 // pred_check_branch
          %341 = sbr.rel (%p339) target = $region52
        $region51: #{tpu_custom_call.1} parent=47 // pred_region
          %vm342 = vcmask 261120
          %343 = vst.msk [vmem:[#allocation2] sm:$0xff] %vm342, 0.0
        $region52: #{tpu_custom_call.1} parent=47 // pred_fallthru
          _
        %v344 = vld [vmem:[%s324] sm:$0xf]
        %v345 = vld [vmem:[%s329] sm:$0xf]
        %v346 = vld [vmem:[%s329 + $0x4] sm:$0xf]
        %v347 = vld [vmem:[%s329 + $0x8] sm:$0xf]
        %v348 = vld [vmem:[%s329 + $0xc] sm:$0xf]
        %v349 = vld [vmem:[%s332] sm:$0x1]
        %v351 = vlaneseq
        %v352 = vshrl.u32 %v351, 7
        %v353 = vsub.s32 0, %v352
        %v354 = vrot.slane %v349, %v353
        %v360 = vunpack.c.l.b16 %v345
        %v361 = vunpack.c.l.b16 %v346
        %v362 = vunpack.c.l.b16 %v347
        %v363 = vunpack.c.l.b16 %v348
        %v364 = vpack.c.b16 %v361, %v360
        %v365 = vpack.c.b16 %v363, %v362
        %vm368 = vcmask 261120
        %v370 = vsel %vm368, %v344, 0
        %372 = vmatprep.subr.bf16.mxu0 0
        %373 = vmatpush1.bf16.msra.mxu0 %v364
        %374 = vmatprep.subr.bf16.mxu0 0
        %375 = vmatpush1.bf16.msra.mxu0 %v365
        %376 = vmatprep.subr.bf16.mxu0 0
        %377 = vmatpush1.bf16.msra.mxu0 0
        %378 = vmatprep.subr.bf16.mxu0 0
        %379 = vmatpush1.bf16.msra.mxu0 0
        %380 = vmatprep.subr.bf16.mxu0 0
        %381 = vmatpush1.bf16.msra.mxu0 0
        %382 = vmatprep.subr.bf16.mxu0 0
        %383 = vmatpush1.bf16.msra.mxu0 0
        %384 = vmatprep.subr.bf16.mxu0 0
        %385 = vmatpush1.bf16.msra.mxu0 0
        %386 = vmatprep.subr.bf16.mxu0 0
        %387 = vmatpush1.bf16.msra.mxu0 0
        %388 = vmatprep.subr.bf16.mxu0 0
        %389 = vmatpush1.bf16.msra.mxu0 0
        %390 = vmatprep.subr.bf16.mxu0 0
        %391 = vmatpush1.bf16.msra.mxu0 0
        %392 = vmatprep.subr.bf16.mxu0 0
        %393 = vmatpush1.bf16.msra.mxu0 0
        %394 = vmatprep.subr.bf16.mxu0 0
        %395 = vmatpush1.bf16.msra.mxu0 0
        %396 = vmatprep.subr.bf16.mxu0 0
        %397 = vmatpush1.bf16.msra.mxu0 0
        %398 = vmatprep.subr.bf16.mxu0 0
        %399 = vmatpush1.bf16.msra.mxu0 0
        %400 = vmatprep.subr.bf16.mxu0 0
        %401 = vmatpush1.bf16.msra.mxu0 0
        %402 = vmatprep.subr.bf16.mxu0 0
        %403 = vmatpush1.bf16.msra.mxu0 0
        %404 = vmatprep.mubr.bf16.mxu0 0
        %405 = vmatmul.mubr.bf16.gmra.mrb[0].mxu0 %v370
        %v406 = vpop.f32.mrb[0].mxu0
        %v407 = vadd.f32 %v354, %v406
        %v408 = vpop.f32.mrb[0].mxu0
        %v409 = vpop.f32.mrb[0].mxu0
        %v410 = vpop.f32.mrb[0].mxu0
        %411 = vdwg.mxu0
        %v412 = vpack.c.bf16 %v407, %v407
        %414 = vrot.lane.b32.xlu0 %v412, 120
        %v415 = vpop.permute.xlu0 %414
        %vm416 = vcmask 64512
        %v418 = vsel %vm416, %v412, 0
        %v421 = vsel %vm416, %v415, 0
        %423 = vmatprep.subr.bf16.mxu0 0
        %424 = vmatpush1.bf16.xpose.msra.mxu0 %v421
        %425 = vmatprep.subr.bf16.mxu0 0
        %426 = vmatpush1.bf16.xpose.msra.mxu0 0
        %427 = vmatprep.subr.bf16.mxu0 0
        %428 = vmatpush1.bf16.xpose.msra.mxu0 0
        %429 = vmatprep.subr.bf16.mxu0 0
        %430 = vmatpush1.bf16.xpose.msra.mxu0 0
        %431 = vmatprep.subr.bf16.mxu0 0
        %432 = vmatpush1.bf16.xpose.msra.mxu0 0
        %433 = vmatprep.subr.bf16.mxu0 0
        %434 = vmatpush1.bf16.xpose.msra.mxu0 0
        %435 = vmatprep.subr.bf16.mxu0 0
        %436 = vmatpush1.bf16.xpose.msra.mxu0 0
        %437 = vmatprep.subr.bf16.mxu0 0
        %438 = vmatpush1.bf16.xpose.msra.mxu0 0
        %439 = vmatprep.subr.bf16.mxu0 0
        %440 = vmatpush1.bf16.xpose.msra.mxu0 0
        %441 = vmatprep.subr.bf16.mxu0 0
        %442 = vmatpush1.bf16.xpose.msra.mxu0 0
        %443 = vmatprep.subr.bf16.mxu0 0
        %444 = vmatpush1.bf16.xpose.msra.mxu0 0
        %445 = vmatprep.subr.bf16.mxu0 0
        %446 = vmatpush1.bf16.xpose.msra.mxu0 0
        %447 = vmatprep.subr.bf16.mxu0 0
        %448 = vmatpush1.bf16.xpose.msra.mxu0 0
        %449 = vmatprep.subr.bf16.mxu0 0
        %450 = vmatpush1.bf16.xpose.msra.mxu0 0
        %451 = vmatprep.subr.bf16.mxu0 0
        %452 = vmatpush1.bf16.xpose.msra.mxu0 0
        %453 = vmatprep.subr.bf16.mxu0 0
        %454 = vmatpush1.bf16.xpose.msra.mxu0 0
        %455 = vmatprep.mubr.bf16.mxu0 0
        %456 = vmatmul.mubr.bf16.gmra.mrb[0].mxu0 %v418
        %v457 = vpop.f32.mrb[0].mxu0
        %v458 = vadd.f32 0.0, %v457
        %v459 = vpop.f32.mrb[0].mxu0
        %v460 = vpop.f32.mrb[0].mxu0
        %v461 = vpop.f32.mrb[0].mxu0
        %462 = vdwg.mxu0
        %v463 = vsel %vm416, %v458, -inf
        %464 = vmax.xlane.f32.xlu0 %v463
        %v465 = vpop.xlane.xlu0 %464
        %v466 = vsub.f32 %v458, %v465
        %v467 = vmul.f32 %v466, 1.442695
        %v468 = vpow.pop %v467
        %v469 = vsel %vm416, %v468, 0.0
        %470 = vadd.xlane.f32.xlu0 %v469
        %v471 = vpop.xlane.xlu0 %470
        %v472 = vrcp.pop %v471
        %v473 = vmul.f32 %v468, %v472
        %v474 = vpack.c.bf16 %v473, %v473
        %475 = vrot.lane.b32.xlu0 %v412, 112
        %v476 = vpop.permute.xlu0 %475
        %v478 = vsel %vm416, %v474, 0
        %vm480 = vcmask 1043456
        %v482 = vsel %vm480, %v476, 0
        %484 = vmatprep.subr.bf16.mxu0 0
        %485 = vmatpush1.bf16.msra.mxu0 %v482
        %486 = vmatprep.subr.bf16.mxu0 0
        %487 = vmatpush1.bf16.msra.mxu0 0
        %488 = vmatprep.subr.bf16.mxu0 0
        %489 = vmatpush1.bf16.msra.mxu0 0
        %490 = vmatprep.subr.bf16.mxu0 0
        %491 = vmatpush1.bf16.msra.mxu0 0
        %492 = vmatprep.subr.bf16.mxu0 0
        %493 = vmatpush1.bf16.msra.mxu0 0
        %494 = vmatprep.subr.bf16.mxu0 0
        %495 = vmatpush1.bf16.msra.mxu0 0
        %496 = vmatprep.subr.bf16.mxu0 0
        %497 = vmatpush1.bf16.msra.mxu0 0
        %498 = vmatprep.subr.bf16.mxu0 0
        %499 = vmatpush1.bf16.msra.mxu0 0
        %500 = vmatprep.subr.bf16.mxu0 0
        %501 = vmatpush1.bf16.msra.mxu0 0
        %502 = vmatprep.subr.bf16.mxu0 0
        %503 = vmatpush1.bf16.msra.mxu0 0
        %504 = vmatprep.subr.bf16.mxu0 0
        %505 = vmatpush1.bf16.msra.mxu0 0
        %506 = vmatprep.subr.bf16.mxu0 0
        %507 = vmatpush1.bf16.msra.mxu0 0
        %508 = vmatprep.subr.bf16.mxu0 0
        %509 = vmatpush1.bf16.msra.mxu0 0
        %510 = vmatprep.subr.bf16.mxu0 0
        %511 = vmatpush1.bf16.msra.mxu0 0
        %512 = vmatprep.subr.bf16.mxu0 0
        %513 = vmatpush1.bf16.msra.mxu0 0
        %514 = vmatprep.subr.bf16.mxu0 0
        %515 = vmatpush1.bf16.msra.mxu0 0
        %516 = vmatprep.mubr.bf16.mxu0 0
        %517 = vmatmul.mubr.bf16.gmra.mrb[0].mxu0 %v478
        %v518 = vpop.f32.mrb[0].mxu0
        %v519 = vadd.f32 0.0, %v518
        %v520 = vpop.f32.mrb[0].mxu0
        %v521 = vpop.f32.mrb[0].mxu0
        %v522 = vpop.f32.mrb[0].mxu0
        %523 = vdwg.mxu0
        %v524 = vld [vmem:[#allocation2] sm:$0xff]
        %v525 = vpack.c.bf16 %v519, %v519
        %v526 = vld [vmem:[%s336] sm:$0xf]
        %v528 = vsel %vm416, %v525, 0
        %v531 = vsel %vm480, %v526, 0
        %533 = vmatprep.subr.bf16.mxu0 0
        %534 = vmatpush1.bf16.msra.mxu0 %v531
        %535 = vmatprep.subr.bf16.mxu0 0
        %536 = vmatpush1.bf16.msra.mxu0 0
        %537 = vmatprep.subr.bf16.mxu0 0
        %538 = vmatpush1.bf16.msra.mxu0 0
        %539 = vmatprep.subr.bf16.mxu0 0
        %540 = vmatpush1.bf16.msra.mxu0 0
        %541 = vmatprep.subr.bf16.mxu0 0
        %542 = vmatpush1.bf16.msra.mxu0 0
        %543 = vmatprep.subr.bf16.mxu0 0
        %544 = vmatpush1.bf16.msra.mxu0 0
        %545 = vmatprep.subr.bf16.mxu0 0
        %546 = vmatpush1.bf16.msra.mxu0 0
        %547 = vmatprep.subr.bf16.mxu0 0
        %548 = vmatpush1.bf16.msra.mxu0 0
        %549 = vmatprep.subr.bf16.mxu0 0
        %550 = vmatpush1.bf16.msra.mxu0 0
        %551 = vmatprep.subr.bf16.mxu0 0
        %552 = vmatpush1.bf16.msra.mxu0 0
        %553 = vmatprep.subr.bf16.mxu0 0
        %554 = vmatpush1.bf16.msra.mxu0 0
        %555 = vmatprep.subr.bf16.mxu0 0
        %556 = vmatpush1.bf16.msra.mxu0 0
        %557 = vmatprep.subr.bf16.mxu0 0
        %558 = vmatpush1.bf16.msra.mxu0 0
        %559 = vmatprep.subr.bf16.mxu0 0
        %560 = vmatpush1.bf16.msra.mxu0 0
        %561 = vmatprep.subr.bf16.mxu0 0
        %562 = vmatpush1.bf16.msra.mxu0 0
        %563 = vmatprep.subr.bf16.mxu0 0
        %564 = vmatpush1.bf16.msra.mxu0 0
        %565 = vmatprep.mubr.bf16.mxu0 0
        %566 = vmatmul.mubr.bf16.gmra.mrb[0].mxu0 %v528
        %v567 = vpop.f32.mrb[0].mxu0
        %v568 = vadd.f32 0.0, %v567
        %v569 = vpop.f32.mrb[0].mxu0
        %v570 = vpop.f32.mrb[0].mxu0
        %v571 = vpop.f32.mrb[0].mxu0
        %572 = vdwg.mxu0
        %v573 = vadd.f32 %v524, %v568
        %574 = vst.msk [vmem:[#allocation2] sm:$0xff] %vm368, %v573
        %p575 = scmp.eq.s32.totalorder %s26, 3
        // Predicated region
        $region53: #{tpu_custom_call.1} parent=47 // pred_check
          %p576 = pneg %p575
        $region54: #{tpu_custom_call.1} parent=47 // pred_check_branch
          %578 = sbr.rel (%p576) target = $region56
        $region55: #{tpu_custom_call.1} parent=47 // pred_region
          %v579 = vld [vmem:[#allocation2] sm:$0xff]
          %v580 = vld [vmem:[%s4] sm:$0x1]
          %v582 = vlaneseq
          %v583 = vshrl.u32 %v582, 7
          %v584 = vsub.s32 0, %v583
          %v585 = vrot.slane %v580, %v584
          %v587 = vadd.f32 %v579, %v585
          %v588 = vunpack.c.l.bf16 %v344
          %v589 = vadd.f32 %v587, %v588
          %v590 = vsel %vm368, %v589, 0.0
          %591 = vadd.xlane.f32.xlu0 %v590
          %v592 = vpop.xlane.xlu0 %591
          %v593 = vrcp.pop 32.0
          %v594 = vmul.f32 %v592, %v593
          %v595 = vsub.f32 %v589, %v594
          %v596 = vmul.f32 %v595, %v595
          %v597 = vsel %vm368, %v596, 0.0
          %598 = vadd.xlane.f32.xlu0 %v597
          %v599 = vpop.xlane.xlu0 %598
          %v600 = vmul.f32 %v599, %v593
          %v601 = vadd.f32 %v600, 1e-12
          %v602 = vrsqrt.pop %v601
          %v603 = vmul.f32 %v595, %v602
          %v604 = vld [vmem:[%s5] sm:$0x1]
          %v606 = vlaneseq
          %v607 = vshrl.u32 %v606, 7
          %v608 = vsub.s32 0, %v607
          %v609 = vrot.slane %v604, %v608
          %v611 = vmul.f32 %v603, %v609
          %v612 = vld [vmem:[%s6] sm:$0x1]
          %v614 = vlaneseq
          %v615 = vshrl.u32 %v614, 7
          %v616 = vsub.s32 0, %v615
          %v617 = vrot.slane %v612, %v616
          %v619 = vadd.f32 %v611, %v617
          %v620 = vpack.c.bf16 %v619, %v619
          %vm621 = vcmask 257024
          %622 = vst.msk [vmem:[%s320] sm:$0xf] %vm621, %v620
        $region56: #{tpu_custom_call.1} parent=47 // pred_fallthru
          _
        %s623 = sand.u32 %s208, 1
        %s624 = scalar_lea.sflag [#allocation4], %s623
        %s625 = sand.u32 %s208, 1
        %s626 = smul.addr %s625, 4
        %s627 = scalar_lea.vmem [#allocation3], %s626
        // Predicated region
        $region57: #{tpu_custom_call.1} parent=47 // pred_check
          %p628 = pneg %p218
        $region58: #{tpu_custom_call.1} parent=47 // pred_check_branch
          %630 = sbr.rel (%p628) target = $region60
        $region59: #{tpu_custom_call.1} parent=47 // pred_region
          %s632 = ssub.s32 64, 64
          %633 = vsyncadd %s624, %s632
          %s634 = smul.addr %s25, 64
          %s635 = scalar_lea.hbm %s7, %s634
          %s637 = sshll.u32 %s627, 4
          %s638 = int_to_ptr.vmem [resolvable:$true] %s637
          %640 = dma.vmem_to_hbm [thread:$0]  %s638, 64, %s635, %s624
        $region60: #{tpu_custom_call.1} parent=47 // pred_fallthru
          _
      $region48: #{tpu_custom_call.1} parent=5 // pred_fallthru
        _
      %p641 = scmp.le.s32.totalorder 2, %s16
      // Predicated region
      $region61: #{tpu_custom_call.1} parent=5 // pred_check
        %p642 = pneg %p641
      $region62: #{tpu_custom_call.1} parent=5 // pred_check_branch
        %644 = sbr.rel (%p642) target = $region64
      $region63: #{tpu_custom_call.1} parent=5 // pred_region
        %s645 = ssub.s32 %s16, 2
        // Predicated region
        $region65: #{tpu_custom_call.1} parent=63 // pred_check
          %p646 = pneg %p224
        $region66: #{tpu_custom_call.1} parent=63 // pred_check_branch
          %648 = sbr.rel (%p646) target = $region68
        $region67: #{tpu_custom_call.1} parent=63 // pred_region
          %s649 = sand.u32 %s209, 1
          %s650 = scalar_lea.sflag [#allocation4], %s649
          %s651 = sand.u32 %s209, 1
          %s652 = smul.addr %s651, 4
          %s653 = scalar_lea.vmem [#allocation3], %s652
          %654 = dma.done %s650, 64
        $region68: #{tpu_custom_call.1} parent=63 // pred_fallthru
          _
      $region64: #{tpu_custom_call.1} parent=5 // pred_fallthru
        _
    $region6: #{tpu_custom_call.1} parent=1 // loop_footer
      %s20 = sadd.s32 1, %s16
    $region7: #{tpu_custom_call.1} parent=1 // loop_footer_branch
      %15 = sbr.rel target = $region3
    $region8: #{tpu_custom_call.1} parent=1 // loop_exit
      _
    %655 = vsyncpa [#allocation4], 1
    %s656 = scalar_lea.sflag [#allocation4], 1
    %657 = vsyncpa %s656, 1

</llo_original>
